<compile_context>
chip_gen: v7x
topology: tpu7x:2x2x1
jax: 0.10.0
libtpu: 0.0.40
codegen_flags: <defaults>
</compile_context>

<pallas_src>
import jax
import jax.numpy as jnp
from jax.experimental import pallas as pl
from jax.experimental.pallas import tpu as pltpu


# Minimum sublane multiple per element size (f32 -> 8, bf16 -> 16, int8 -> 32).
_SUBLANE = {1: 32, 2: 16, 4: 8, 8: 8}
# Per-block byte budget for the x tile. x and out are each double-buffered,
# so ~4x this lands in VMEM -> ~16 MiB, comfortably under the 32 MiB scoped
# limit we request below (and under v7x's 64 MiB physical VMEM).
_BLOCK_BYTE_BUDGET = 4 * 1024 * 1024
_VMEM_LIMIT_BYTES = 32 * 1024 * 1024


def _reweight_kernel(x_ref, w_ref, o_ref):
    # Elementwise hot path: broadcast-multiply the (tile_b, tile_l) block of x
    # by the (1, tile_l) f32 reweight row; cast only the product.
    x = x_ref[...].astype(jnp.float32)
    o_ref[...] = (x * w_ref[...]).astype(o_ref.dtype)


def _round_down_to_multiple(v: int, m: int) -> int:
    return max(m, (v // m) * m)


def _lane_dense_view(B: int, D: int):
    """If D < 128, find a flattened (R, L) view with L a multiple of 128 whose
    lane pattern has period D (so the reweight row can be pre-tiled to width L).
    Returns (R, L) or None."""
    if D >= 128:
        return None
    total = B * D
    for L in (1024, 512, 256, 128):
        if total % L == 0 and L % D == 0:
            return total // L, L
    return None


def _pick_row_tile(n_rows: int, row_bytes: int, sublane: int) -> int:
    """Pick a row tile (multiple of `sublane`, or the full extent) so a single
    block stays under the byte budget and the grid iterates over batch."""
    if n_rows <= sublane:
        return n_rows  # full-extent block is always legal
    max_rows = max(1, _BLOCK_BYTE_BUDGET // max(1, row_bytes))
    if max_rows >= n_rows:
        return n_rows
    return _round_down_to_multiple(max_rows, sublane)


def reweight_projection_head(x: jax.Array, reweights: jax.Array, *, in_place: bool = False):
    """Applies x * reweights (broadcast over leading dims) with a Pallas TPU kernel.

    x:         (..., D) float array
    reweights: (D,)     float array (kept in f32 inside the kernel)
    in_place:  alias x's HBM buffer with the output (only if the caller no
               longer needs x).
    """
    if reweights is None:
        raise ValueError("no projection head used")
    orig_shape = x.shape
    D = orig_shape[-1]
    assert reweights.shape == (D,)

    # Flatten arbitrary leading dims into a single batch axis.
    B = 1
    for s in orig_shape[:-1]:
        B *= s
    x2d = x.reshape(B, D)

    itemsize = jnp.dtype(x.dtype).itemsize
    sublane = _SUBLANE.get(itemsize, 8)
    w_f32 = reweights.astype(jnp.float32)

    # Lane-dense fast path for small D: flatten so the minor dim is >= 128 and
    # a multiple of 128 (full-width unmasked vst instead of masked partials).
    view = _lane_dense_view(B, D)
    if view is not None:
        rows, lanes = view
        x_in = x2d.reshape(rows, lanes)
        w_row = jnp.tile(w_f32, lanes // D).reshape(1, lanes)
    else:
        rows, lanes = B, D
        x_in = x2d
        w_row = w_f32.reshape(1, D)

    # Tile the lane dim only when even a single sublane-high stripe of full
    # rows would bust the budget (requires 128-aligned lane tiles).
    if lanes % 128 == 0 and lanes * itemsize * sublane > _BLOCK_BYTE_BUDGET:
        tile_l = min(
            lanes,
            _round_down_to_multiple(_BLOCK_BYTE_BUDGET // (sublane * itemsize), 128),
        )
    else:
        tile_l = lanes

    tile_b = _pick_row_tile(rows, tile_l * itemsize, sublane)

    # Lane tiles outermost so the (1, tile_l) reweight block stays resident
    # across the whole inner sweep over row tiles (no re-DMA of the weights).
    grid = (pl.cdiv(lanes, tile_l), pl.cdiv(rows, tile_b))

    call_kwargs = {}
    if in_place:
        call_kwargs["input_output_aliases"] = {0: 0}

    out = pl.pallas_call(
        _reweight_kernel,
        out_shape=jax.ShapeDtypeStruct((rows, lanes), x.dtype),
        grid_spec=pltpu.PrefetchScalarGridSpec(
            num_scalar_prefetch=0,
            grid=grid,
            in_specs=[
                pl.BlockSpec((tile_b, tile_l), lambda j, i: (i, j)),  # x tile
                pl.BlockSpec((1, tile_l), lambda j, i: (0, j)),       # reweight row (resident per lane-tile)
            ],
            out_specs=pl.BlockSpec((tile_b, tile_l), lambda j, i: (i, j)),
        ),
        compiler_params=pltpu.CompilerParams(
            dimension_semantics=("parallel", "parallel"),  # both TCs on v7x can stream independent tiles
            vmem_limit_bytes=_VMEM_LIMIT_BYTES,
        ),
        **call_kwargs,
    )(x_in, w_row)

    return out.reshape(orig_shape)


def make_reweights(representation_dim: int, kappa: float, dtype=jnp.float32) -> jax.Array:
    # Deterministic parameter init, matching torch.tensor([1 / kappa**i ...]).
    i = jnp.arange(representation_dim, dtype=jnp.float32)
    return (1.0 / (kappa ** i)).astype(dtype)


if __name__ == "__main__":
    # Small shapes consistent with the module: batch=8, representation_dim=32.
    representation_dim = 32
    kappa = 1.5
    batch = 8

    key = jax.random.PRNGKey(0)
    x = jax.random.normal(key, (batch, representation_dim), dtype=jnp.float32)
    reweights = make_reweights(representation_dim, kappa)

    out = jax.block_until_ready(reweight_projection_head(x, reweights))
    ref = x * reweights[None, :]
    assert out.shape == (batch, representation_dim)
    assert out.dtype == x.dtype
    assert jnp.allclose(out, ref, rtol=1e-6, atol=1e-6)

    # Second (still small) shape exercising the non-flattened 2-D tiled path.
    x2 = jax.random.normal(jax.random.PRNGKey(0), (64, 256), dtype=jnp.float32)
    w2 = make_reweights(256, 1.05)
    out2 = jax.block_until_ready(reweight_projection_head(x2, w2))
    ref2 = x2 * w2[None, :]
    assert jnp.allclose(out2, ref2, rtol=1e-6, atol=1e-6)

    # Third: leading-dim flattening + bf16 input (f32 compute, cast on store).
    x3 = jax.random.normal(jax.random.PRNGKey(0), (2, 8, 32), dtype=jnp.bfloat16)
    w3 = make_reweights(32, kappa)
    out3 = jax.block_until_ready(reweight_projection_head(x3, w3))
    ref3 = (x3.astype(jnp.float32) * w3[None, None, :]).astype(jnp.bfloat16)
    assert out3.shape == x3.shape and out3.dtype == x3.dtype
    assert jnp.allclose(out3.astype(jnp.float32), ref3.astype(jnp.float32),
                        rtol=1e-2, atol=1e-2)

    print("KERNEL_OK")
</pallas_src>

<mosaic_0001>
module attributes {stable_mosaic.version = 11 : i64} {
  func.func @_reweight_kernel(%arg0: i32, %arg1: i32, %arg2: memref<1x256xf32, #tpu.memory_space<vmem>>, %arg3: memref<1x256xf32, #tpu.memory_space<vmem>>, %arg4: memref<1x256xf32, #tpu.memory_space<vmem>>) attributes {dimension_semantics = [#tpu.dimension_semantics<parallel>, #tpu.dimension_semantics<parallel>], iteration_bounds = array<i64: 1, 1>, scalar_prefetch = 0 : i64, scratch_operands = 0 : i64, tpu.core_type = #tpu.core_type<tc>, window_params = [{transform_indices = @transform_0, window_bounds = array<i64: 1, 256>}, {transform_indices = @transform_1, window_bounds = array<i64: 1, 256>}, {transform_indices = @transform_2, window_bounds = array<i64: 1, 256>}]} {
    %c0 = arith.constant 0 : index
    %c0_0 = arith.constant 0 : index
    %0 = vector.load %arg2[%c0, %c0_0] : memref<1x256xf32, #tpu.memory_space<vmem>>, vector<1x256xf32>
    %c0_1 = arith.constant 0 : index
    %c0_2 = arith.constant 0 : index
    %1 = vector.load %arg3[%c0_1, %c0_2] : memref<1x256xf32, #tpu.memory_space<vmem>>, vector<1x256xf32>
    %2 = arith.mulf %0, %1 : vector<1x256xf32>
    %c0_3 = arith.constant 0 : index
    %c0_4 = arith.constant 0 : index
    %3 = vector.load %arg4[%c0_3, %c0_4] : memref<1x256xf32, #tpu.memory_space<vmem>>, vector<1x256xf32>
    tpu.vector_store %arg4[%c0_3, %c0_4], %2 {strides = array<i32>} : memref<1x256xf32, #tpu.memory_space<vmem>>, vector<1x256xf32>,
    return
  }
  func.func @transform_0(%arg0: i32, %arg1: i32) -> (i32, i32) {
    %c0_i32 = arith.constant 0 : i32
    return %arg1, %arg0 : i32, i32
  }
  func.func @transform_1(%arg0: i32, %arg1: i32) -> (i32, i32) {
    %c0_i32 = arith.constant 0 : i32
    %c0_i32_0 = arith.constant 0 : i32
    return %c0_i32, %arg0 : i32, i32
  }
  func.func @transform_2(%arg0: i32, %arg1: i32) -> (i32, i32) {
    %c0_i32 = arith.constant 0 : i32
    return %arg1, %arg0 : i32, i32
  }
}

</mosaic_0001>

<llo_original>
// kernel: tpu_custom_call.1
$region0: #{tpu_custom_call.1}
  #allocation0 [shape = 'u32[]', space=smem, size = 0x4, offset = 0x4, fixed_abs, tag = 'smem constant byte address 0x4 - core index']
  #allocation1 [shape = 'u32[144,128]{1,0:T(1,128)}', space=vmem, size = 0x12000, scoped, tag = 'internal scratch']
  %s0 = inlined_call_operand.hbm [shape: f32[1,256], index: 0, kind: input, shape index: {}]
  %s1 = inlined_call_operand.vmem [shape: f32[1,256], index: 1, kind: input, shape index: {}]
  %s2 = inlined_call_operand.hbm [shape: f32[1,256], index: 2, kind: output, shape index: {}]
  %s3 = sld [smem:[#allocation0]]
  $region22: #{tpu_custom_call.1} parent=0
    _
  %s5 = ssub.s32 1, %s3
  %s6 = scalar_select 0, %s5, %s3
  $region1: #{tpu_custom_call.1} parent=0
    #allocation2 [shape = 'u8[1024]{0}', space=vmem, size = 0x400, scoped, tag = 'input window, operand 0, single buffered']
    #allocation3 [shape = 's32[1]{0}', space=sflag, size = 0x4, scoped, tag = 'scoped memory for tpu_custom_call.1']
    #allocation4 [shape = 's32[1]{0}', space=sflag, size = 0x4, scoped, tag = 'scoped memory for tpu_custom_call.1']
    #allocation5 [shape = 'u8[1024]{0}', space=vmem, size = 0x400, scoped, tag = 'output window, operand 0, single buffered']
    %7 = vsyncpa [#allocation3], 0
    %8 = vsyncpa [#allocation4], 0
    // Predicated region
    $region2: #{tpu_custom_call.1} parent=1 // pred_check
      _
    $region3: #{tpu_custom_call.1} parent=1 // pred_check_branch
      %10 = sbr.rel (0) target = $region5
    $region4: #{tpu_custom_call.1} parent=1 // pred_region
      %s12 = ssub.s32 32, 32
      %13 = vsyncadd [#allocation3], %s12
      %s15 = sshll.u32 [#allocation2], 4
      %s16 = int_to_ptr.vmem [resolvable:$true] %s15
      %18 = dma.hbm_to_vmem [thread:$0]  %s0, 32, %s16, [#allocation3]
    $region5: #{tpu_custom_call.1} parent=1 // pred_fallthru
      _
    // Predicated region
    $region6: #{tpu_custom_call.1} parent=1 // pred_check
      _
    $region7: #{tpu_custom_call.1} parent=1 // pred_check_branch
      %20 = sbr.rel (0) target = $region9
    $region8: #{tpu_custom_call.1} parent=1 // pred_region
      _
    $region9: #{tpu_custom_call.1} parent=1 // pred_fallthru
      _
    // Predicated region
    $region10: #{tpu_custom_call.1} parent=1 // pred_check
      _
    $region11: #{tpu_custom_call.1} parent=1 // pred_check_branch
      %22 = sbr.rel (0) target = $region13
    $region12: #{tpu_custom_call.1} parent=1 // pred_region
      %23 = dma.done [#allocation3], 32
    $region13: #{tpu_custom_call.1} parent=1 // pred_fallthru
      _
    %v24 = vld [vmem:[#allocation2] sm:$0x3]
    %v25 = vld [vmem:[%s1] sm:$0x3]
    %v26 = vmul.f32 %v24, %v25
    %v27 = vlaneseq
    %vm28 = vcmp.ge.s32.totalorder %v27, 0
    %vm29 = vcmp.lt.s32.totalorder %v27, 256
    %vm30 = vmand %vm28, %vm29
    %31 = vst.msk [vmem:[#allocation5] sm:$0x3] %vm30, %v26
    // Predicated region
    $region14: #{tpu_custom_call.1} parent=1 // pred_check
      _
    $region15: #{tpu_custom_call.1} parent=1 // pred_check_branch
      %33 = sbr.rel (0) target = $region17
    $region16: #{tpu_custom_call.1} parent=1 // pred_region
      %s35 = ssub.s32 32, 32
      %36 = vsyncadd [#allocation4], %s35
      %s38 = sshll.u32 [#allocation5], 4
      %s39 = int_to_ptr.vmem [resolvable:$true] %s38
      %41 = dma.vmem_to_hbm [thread:$0]  %s39, 32, %s2, [#allocation4]
    $region17: #{tpu_custom_call.1} parent=1 // pred_fallthru
      _
    // Predicated region
    $region18: #{tpu_custom_call.1} parent=1 // pred_check
      _
    $region19: #{tpu_custom_call.1} parent=1 // pred_check_branch
      %43 = sbr.rel (0) target = $region21
    $region20: #{tpu_custom_call.1} parent=1 // pred_region
      %44 = dma.done [#allocation4], 32
    $region21: #{tpu_custom_call.1} parent=1 // pred_fallthru
      _
    %45 = vsyncpa [#allocation3], 1
    %46 = vsyncpa [#allocation4], 1

</llo_original>
